<compile_context>
chip_gen: v5e
topology: v5e:2x2
jax: 0.10.0
libtpu: 0.0.40
codegen_flags: <defaults>
</compile_context>

<pallas_src>
import jax
import jax.numpy as jnp
from jax.experimental import pallas as pl
from jax.experimental.pallas import tpu as pltpu


def _lane_group_allreduce(s, C, W):
    """Sum the W lane groups (each C lanes wide) along the last axis of s.

    s: (R, W*C) f32.  Returns (R, W*C) where every lane holds the per-channel
    sum over all W groups (i.e. already broadcast back across groups).  Uses
    XLU lane rolls only — no MXU work, no gmat.
    """
    WC = W * C
    if W & (W - 1) == 0:                      # power-of-two W: log2(W) rolls
        shift = C
        while shift < WC:
            s = s + pltpu.roll(s, shift=shift, axis=1)
            shift *= 2
        return s
    total = s                                 # generic fallback: W-1 rolls
    for g in range(1, W):
        total = total + pltpu.roll(s, shift=g * C, axis=1)
    return total


def basic_block_kernel(x_ref, band1_ref, band2_ref, g1_ref, beta1_ref,
                       g2_ref, beta2_ref, o_ref, zp_ref):
    """Fused BasicBlock forward.

    x_ref     : (N, H, W*C)          input, NHWC with (W, C) fused into lanes, f32
    band*_ref : (3*(W+1)*C, W*C)     banded conv weights, kh stacked along K, bf16
    g*_ref    : (1, W*C)             BN gamma, tiled across the W lane groups, f32
    beta*_ref : (1, W*C)             BN beta, tiled across the W lane groups, f32
    o_ref     : (N, H, W*C)          output, f32
    zp_ref    : VMEM (N, H+4, (W+1)*C) bf16 scratch with zero halo rows at
                scratch rows 1 and H+2 (interior lives at rows 2..H+1 so all
                packed-bf16 stores are sublane-pair aligned) and a zero
                right-pad lane block; zeroed once, reused for both convs.
    """
    N, H, WC = x_ref.shape
    L = band1_ref.shape[0] // 3       # (W + 1) * C
    C = L - WC
    W = WC // C
    NH = N * H
    BASE = 2                          # scratch row of input row 0
    eps = 1e-5
    inv_m = 1.0 / float(N * H * W)

    # Zero the (tiny, bf16) haloed scratch once: halo rows and the right-pad
    # lane block stay zero across both convs.
    zp_ref[...] = jnp.zeros(zp_ref.shape, zp_ref.dtype)

    def conv3x3(band_ref):
        # One fat bf16 MXU matmul per conv:
        #   (N*H, 3*(W+1)*C) @ (3*(W+1)*C, W*C) -> f32 (N*H, W*C)
        # The kw taps + Cin are folded into the banded slab; the kh taps are
        # stacked along K, so the LHS is the concat of 3 shifted row windows
        # of the haloed buffer (loaded once, sliced in-register).
        z = zp_ref[...]                                        # (N, H+4, L) bf16
        slabs = [z[:, kh + 1:kh + 1 + H, :].reshape(NH, L) for kh in range(3)]
        lhs = jnp.concatenate(slabs, axis=-1)                  # (NH, 3L) bf16
        return jnp.dot(lhs, band_ref[...],
                       preferred_element_type=jnp.float32)

    def batchnorm(acc, gamma, beta):
        # Single-pass batch statistics in f32: sublane sums, then an XLU
        # lane-group all-reduce (result already broadcast across the W groups).
        s = jnp.concatenate(
            [jnp.sum(acc, axis=0, keepdims=True),
             jnp.sum(acc * acc, axis=0, keepdims=True)], axis=0)   # (2, WC)
        s = _lane_group_allreduce(s, C, W)
        mu = s[0:1, :] * inv_m
        var = s[1:2, :] * inv_m - mu * mu     # biased variance (PyTorch BN fwd)
        return (acc - mu) * jax.lax.rsqrt(var + eps) * gamma + beta

    # ---- conv1 -> bn1 -> relu -------------------------------------------------
    zp_ref[:, BASE:BASE + H, 0:WC] = x_ref[...].astype(jnp.bfloat16)
    y = jnp.maximum(batchnorm(conv3x3(band1_ref), g1_ref[...], beta1_ref[...]),
                    0.0)

    # ---- conv2 -> bn2 (halo / right pad of zp_ref are still zero) --------------
    zp_ref[:, BASE:BASE + H, 0:WC] = y.reshape(N, H, WC).astype(jnp.bfloat16)
    y = batchnorm(conv3x3(band2_ref), g2_ref[...], beta2_ref[...])

    # ---- residual add + relu; identity re-read here to keep live ranges short -
    y = jnp.maximum(y + x_ref[...].reshape(NH, WC), 0.0)
    o_ref[...] = y.reshape(N, H, WC).astype(o_ref.dtype)


def _full_spec(shape):
    # Whole array as a single block: batch-stat BN needs the full batch
    # resident anyway at this toy size (see TODO about tiling at real sizes).
    return pl.BlockSpec(shape, lambda i: (0,) * len(shape))


def _banded_weights(w, W, C):
    """HWIO (3, 3, Cin, Cout) -> (3*(W+1)*C, W*Cout) banded matrix, bf16.

    band[kh*(W+1)*C + a*C + ci, q*Cout + co] = w[kh, a - q + 1, ci, co]
    if 0 <= a-q+1 < 3 else 0.  The left W-pad is implicit (those band rows do
    not exist); the right W-pad is the zeroed lane block a == W in the kernel
    scratch.  kh is stacked along K to match the concat order of the LHS.
    """
    WL = W + 1
    a = jnp.arange(WL)[None, :, None]
    q = jnp.arange(W)[None, None, :]
    kw = jnp.arange(3)[:, None, None]
    sel = (a == q + kw - 1).astype(w.dtype)                  # (3, WL, W)
    band = jnp.einsum('xaq,kxio->kaiqo', sel, w)             # (3, WL, Ci, W, Co)
    c_out = w.shape[-1]
    return band.reshape(3 * WL * C, W * c_out).astype(jnp.bfloat16)


def prepare_params(w1, g1, b1, w2, g2, b2, W, C):
    """Static weight preprocessing, hoisted out of the per-call path."""
    band1 = _banded_weights(w1, W, C)
    band2 = _banded_weights(w2, W, C)
    g1t = jnp.tile(g1.reshape(1, C), (1, W)).astype(jnp.float32)
    b1t = jnp.tile(b1.reshape(1, C), (1, W)).astype(jnp.float32)
    g2t = jnp.tile(g2.reshape(1, C), (1, W)).astype(jnp.float32)
    b2t = jnp.tile(b2.reshape(1, C), (1, W)).astype(jnp.float32)
    return band1, band2, g1t, b1t, g2t, b2t


@jax.jit
def basic_block_fused(x_nchw, band1, band2, g1t, b1t, g2t, b2t):
    N, C, H, W = x_nchw.shape
    WC = W * C
    L = (W + 1) * C

    # NCHW -> NHWC -> (N, H, W*C): lane-dense activation layout for the kernel.
    x = jnp.transpose(x_nchw, (0, 2, 3, 1)).reshape(N, H, WC)

    out = pl.pallas_call(
        basic_block_kernel,
        out_shape=jax.ShapeDtypeStruct((N, H, WC), x.dtype),
        grid=(1,),
        in_specs=[
            _full_spec((N, H, WC)),
            _full_spec((3 * L, WC)),
            _full_spec((3 * L, WC)),
            _full_spec((1, WC)),
            _full_spec((1, WC)),
            _full_spec((1, WC)),
            _full_spec((1, WC)),
        ],
        out_specs=_full_spec((N, H, WC)),
        scratch_shapes=[pltpu.VMEM((N, H + 4, L), jnp.bfloat16)],
        compiler_params=pltpu.CompilerParams(
            dimension_semantics=("arbitrary",)),
    )(x, band1, band2, g1t, b1t, g2t, b2t)

    out = out.reshape(N, H, W, C)
    return jnp.transpose(out, (0, 3, 1, 2))                   # NHWC -> NCHW


def basic_block(x_nchw, w1, g1, b1, w2, g2, b2):
    _, C, _, W = x_nchw.shape
    params = prepare_params(w1, g1, b1, w2, g2, b2, W, C)
    return basic_block_fused(x_nchw, *params)


def reference(x_nchw, w1, g1, b1, w2, g2, b2):
    """Pure-JAX reference with identical semantics (NHWC internally, f32)."""
    eps = 1e-5
    x = jnp.transpose(x_nchw, (0, 2, 3, 1))

    def conv(a, w):
        return jax.lax.conv_general_dilated(
            a, w, window_strides=(1, 1), padding=((1, 1), (1, 1)),
            dimension_numbers=("NHWC", "HWIO", "NHWC"))

    def bn(a, g, b):
        mu = jnp.mean(a, axis=(0, 1, 2), keepdims=True)
        var = jnp.mean((a - mu) ** 2, axis=(0, 1, 2), keepdims=True)
        return (a - mu) * jax.lax.rsqrt(var + eps) * g + b

    y = jnp.maximum(bn(conv(x, w1), g1, b1), 0.0)
    y = bn(conv(y, w2), g2, b2) + x
    y = jnp.maximum(y, 0.0)
    return jnp.transpose(y, (0, 3, 1, 2))


if __name__ == "__main__":
    # Small shapes consistent with BasicBlock(in_channels=8, out_channels=8,
    # stride=1, downsample=None); W*C = 128 keeps the layout lane-dense.
    N, C, H, W = 2, 8, 16, 16

    key = jax.random.PRNGKey(0)
    kx, kw1, kw2, kg1, kb1, kg2, kb2 = jax.random.split(key, 7)

    x = jax.random.normal(kx, (N, C, H, W), jnp.float32)
    # conv weights in HWIO layout, deterministic init
    w1 = jax.random.normal(kw1, (3, 3, C, C), jnp.float32) * 0.1
    w2 = jax.random.normal(kw2, (3, 3, C, C), jnp.float32) * 0.1
    g1 = 1.0 + 0.1 * jax.random.normal(kg1, (C,), jnp.float32)
    b1 = 0.1 * jax.random.normal(kb1, (C,), jnp.float32)
    g2 = 1.0 + 0.1 * jax.random.normal(kg2, (C,), jnp.float32)
    b2 = 0.1 * jax.random.normal(kb2, (C,), jnp.float32)

    # Hoist static weight preprocessing out of the measured kernel call.
    params = prepare_params(w1, g1, b1, w2, g2, b2, W, C)
    params = tuple(jax.block_until_ready(p) for p in params)

    out = basic_block_fused(x, *params)
    jax.block_until_ready(out)

    ref = reference(x, w1, g1, b1, w2, g2, b2)
    max_err = float(jnp.max(jnp.abs(out - ref)))
    mean_err = float(jnp.mean(jnp.abs(out - ref)))
    assert out.shape == (N, C, H, W)
    # bf16 MXU operands (f32 accumulation) => tolerance well above bf16 noise.
    assert max_err < 1e-1, f"max abs diff vs reference too large: {max_err}"
    assert mean_err < 2e-2, f"mean abs diff vs reference too large: {mean_err}"

    print("KERNEL_OK")
</pallas_src>

<mosaic_0001>
module attributes {stable_mosaic.version = 11 : i64} {
  func.func @basic_block_kernel(%arg0: i32, %arg1: memref<2x16x128xf32, #tpu.memory_space<vmem>>, %arg2: memref<408x128xbf16, #tpu.memory_space<vmem>>, %arg3: memref<408x128xbf16, #tpu.memory_space<vmem>>, %arg4: memref<1x128xf32, #tpu.memory_space<vmem>>, %arg5: memref<1x128xf32, #tpu.memory_space<vmem>>, %arg6: memref<1x128xf32, #tpu.memory_space<vmem>>, %arg7: memref<1x128xf32, #tpu.memory_space<vmem>>, %arg8: memref<2x16x128xf32, #tpu.memory_space<vmem>>, %arg9: memref<2x20x136xbf16, #tpu.memory_space<vmem>>) attributes {dimension_semantics = [#tpu.dimension_semantics<arbitrary>], iteration_bounds = array<i64: 1>, scalar_prefetch = 0 : i64, scratch_operands = 1 : i64, tpu.core_type = #tpu.core_type<tc>, window_params = [{pipeline_mode = #tpu.pipeline_mode<synchronous>, transform_indices = @transform_0, window_bounds = array<i64: 2, 16, 128>}, {pipeline_mode = #tpu.pipeline_mode<synchronous>, transform_indices = @transform_1, window_bounds = array<i64: 408, 128>}, {pipeline_mode = #tpu.pipeline_mode<synchronous>, transform_indices = @transform_2, window_bounds = array<i64: 408, 128>}, {pipeline_mode = #tpu.pipeline_mode<synchronous>, transform_indices = @transform_3, window_bounds = array<i64: 1, 128>}, {pipeline_mode = #tpu.pipeline_mode<synchronous>, transform_indices = @transform_4, window_bounds = array<i64: 1, 128>}, {pipeline_mode = #tpu.pipeline_mode<synchronous>, transform_indices = @transform_5, window_bounds = array<i64: 1, 128>}, {pipeline_mode = #tpu.pipeline_mode<synchronous>, transform_indices = @transform_6, window_bounds = array<i64: 1, 128>}, {pipeline_mode = #tpu.pipeline_mode<synchronous>, transform_indices = @transform_7, window_bounds = array<i64: 2, 16, 128>}]} {
    %cst = arith.constant 0.000000e+00 : bf16
    %0 = vector.broadcast %cst : bf16 to vector<2x20x136xbf16>
    %c0 = arith.constant 0 : index
    %c0_0 = arith.constant 0 : index
    %c0_1 = arith.constant 0 : index
    %1 = vector.load %arg9[%c0, %c0_0, %c0_1] : memref<2x20x136xbf16, #tpu.memory_space<vmem>>, vector<2x20x136xbf16>
    tpu.vector_store %arg9[%c0, %c0_0, %c0_1], %0 {strides = array<i32>} : memref<2x20x136xbf16, #tpu.memory_space<vmem>>, vector<2x20x136xbf16>,
    %c0_2 = arith.constant 0 : index
    %c0_3 = arith.constant 0 : index
    %c0_4 = arith.constant 0 : index
    %2 = vector.load %arg1[%c0_2, %c0_3, %c0_4] : memref<2x16x128xf32, #tpu.memory_space<vmem>>, vector<2x16x128xf32>
    %3 = arith.truncf %2 : vector<2x16x128xf32> to vector<2x16x128xbf16>
    %c0_5 = arith.constant 0 : index
    %c2 = arith.constant 2 : index
    %c0_6 = arith.constant 0 : index
    %4 = vector.load %arg9[%c0_5, %c2, %c0_6] : memref<2x20x136xbf16, #tpu.memory_space<vmem>>, vector<2x16x128xbf16>
    tpu.vector_store %arg9[%c0_5, %c2, %c0_6], %3 {strides = array<i32>} : memref<2x20x136xbf16, #tpu.memory_space<vmem>>, vector<2x16x128xbf16>,
    %c0_7 = arith.constant 0 : index
    %c0_8 = arith.constant 0 : index
    %c0_9 = arith.constant 0 : index
    %5 = vector.load %arg9[%c0_7, %c0_8, %c0_9] : memref<2x20x136xbf16, #tpu.memory_space<vmem>>, vector<2x20x136xbf16>
    %6 = vector.extract_strided_slice %5 {offsets = [0, 1, 0], sizes = [2, 16, 136], strides = [1, 1, 1]} : vector<2x20x136xbf16> to vector<2x16x136xbf16>
    %7 = vector.shape_cast %6 : vector<2x16x136xbf16> to vector<32x136xbf16>
    %8 = vector.extract_strided_slice %5 {offsets = [0, 2, 0], sizes = [2, 16, 136], strides = [1, 1, 1]} : vector<2x20x136xbf16> to vector<2x16x136xbf16>
    %9 = vector.shape_cast %8 : vector<2x16x136xbf16> to vector<32x136xbf16>
    %10 = vector.extract_strided_slice %5 {offsets = [0, 3, 0], sizes = [2, 16, 136], strides = [1, 1, 1]} : vector<2x20x136xbf16> to vector<2x16x136xbf16>
    %11 = vector.shape_cast %10 : vector<2x16x136xbf16> to vector<32x136xbf16>
    %12 = tpu.concatenate %7, %9, %11 in 1 : vector<32x136xbf16>, vector<32x136xbf16>, vector<32x136xbf16> -> vector<32x408xbf16>
    %c0_10 = arith.constant 0 : index
    %c0_11 = arith.constant 0 : index
    %13 = vector.load %arg2[%c0_10, %c0_11] : memref<408x128xbf16, #tpu.memory_space<vmem>>, vector<408x128xbf16>
    %cst_12 = arith.constant dense<0.000000e+00> : vector<32x128xf32>
    %14 = tpu.matmul %12, %13, %cst_12 {dimension_numbers = #tpu.dot_dimension_numbers<[1], [0], [0], [1], [0, 0, 1, 1], [], []>} : vector<32x408xbf16>, vector<408x128xbf16>, vector<32x128xf32> -> vector<32x128xf32>
    %c0_13 = arith.constant 0 : index
    %c0_14 = arith.constant 0 : index
    %15 = vector.load %arg4[%c0_13, %c0_14] : memref<1x128xf32, #tpu.memory_space<vmem>>, vector<1x128xf32>
    %c0_15 = arith.constant 0 : index
    %c0_16 = arith.constant 0 : index
    %16 = vector.load %arg5[%c0_15, %c0_16] : memref<1x128xf32, #tpu.memory_space<vmem>>, vector<1x128xf32>
    %cst_17 = arith.constant dense<0.000000e+00> : vector<128xf32>
    %17 = vector.multi_reduction <add>, %14, %cst_17 [0] : vector<32x128xf32> to vector<128xf32>
    %18 = vector.shape_cast %17 : vector<128xf32> to vector<1x128xf32>
    %19 = arith.mulf %14, %14 : vector<32x128xf32>
    %cst_18 = arith.constant dense<0.000000e+00> : vector<128xf32>
    %20 = vector.multi_reduction <add>, %19, %cst_18 [0] : vector<32x128xf32> to vector<128xf32>
    %21 = vector.shape_cast %20 : vector<128xf32> to vector<1x128xf32>
    %22 = tpu.concatenate %18, %21 in 0 : vector<1x128xf32>, vector<1x128xf32> -> vector<2x128xf32>
    %c8_i32 = arith.constant 8 : i32
    %23 = tpu.dynamic_rotate %22 by %c8_i32 dim 1 : vector<2x128xf32>, i32 -> vector<2x128xf32>
    %24 = arith.addf %22, %23 : vector<2x128xf32>
    %c16_i32 = arith.constant 16 : i32
    %25 = tpu.dynamic_rotate %24 by %c16_i32 dim 1 : vector<2x128xf32>, i32 -> vector<2x128xf32>
    %26 = arith.addf %24, %25 : vector<2x128xf32>
    %c32_i32 = arith.constant 32 : i32
    %27 = tpu.dynamic_rotate %26 by %c32_i32 dim 1 : vector<2x128xf32>, i32 -> vector<2x128xf32>
    %28 = arith.addf %26, %27 : vector<2x128xf32>
    %c64_i32 = arith.constant 64 : i32
    %29 = tpu.dynamic_rotate %28 by %c64_i32 dim 1 : vector<2x128xf32>, i32 -> vector<2x128xf32>
    %30 = arith.addf %28, %29 : vector<2x128xf32>
    %31 = vector.extract_strided_slice %30 {offsets = [0, 0], sizes = [1, 128], strides = [1, 1]} : vector<2x128xf32> to vector<1x128xf32>
    %cst_19 = arith.constant 0.001953125 : f32
    %32 = vector.broadcast %cst_19 : f32 to vector<1x128xf32>
    %33 = arith.mulf %31, %32 : vector<1x128xf32>
    %34 = vector.extract_strided_slice %30 {offsets = [1, 0], sizes = [1, 128], strides = [1, 1]} : vector<2x128xf32> to vector<1x128xf32>
    %cst_20 = arith.constant 0.001953125 : f32
    %35 = vector.broadcast %cst_20 : f32 to vector<1x128xf32>
    %36 = arith.mulf %34, %35 : vector<1x128xf32>
    %37 = arith.mulf %33, %33 : vector<1x128xf32>
    %38 = arith.subf %36, %37 : vector<1x128xf32>
    %39 = vector.broadcast %33 : vector<1x128xf32> to vector<32x128xf32>
    %40 = arith.subf %14, %39 : vector<32x128xf32>
    %cst_21 = arith.constant 9.99999974E-6 : f32
    %41 = vector.broadcast %cst_21 : f32 to vector<1x128xf32>
    %42 = arith.addf %38, %41 : vector<1x128xf32>
    %43 = math.rsqrt %42 : vector<1x128xf32>
    %44 = vector.broadcast %43 : vector<1x128xf32> to vector<32x128xf32>
    %45 = arith.mulf %40, %44 : vector<32x128xf32>
    %46 = vector.broadcast %15 : vector<1x128xf32> to vector<32x128xf32>
    %47 = arith.mulf %45, %46 : vector<32x128xf32>
    %48 = vector.broadcast %16 : vector<1x128xf32> to vector<32x128xf32>
    %49 = arith.addf %47, %48 : vector<32x128xf32>
    %cst_22 = arith.constant 0.000000e+00 : f32
    %50 = vector.broadcast %cst_22 : f32 to vector<32x128xf32>
    %51 = arith.maximumf %49, %50 : vector<32x128xf32>
    %52 = vector.shape_cast %51 : vector<32x128xf32> to vector<2x16x128xf32>
    %53 = arith.truncf %52 : vector<2x16x128xf32> to vector<2x16x128xbf16>
    %c0_23 = arith.constant 0 : index
    %c2_24 = arith.constant 2 : index
    %c0_25 = arith.constant 0 : index
    %54 = vector.load %arg9[%c0_23, %c2_24, %c0_25] : memref<2x20x136xbf16, #tpu.memory_space<vmem>>, vector<2x16x128xbf16>
    tpu.vector_store %arg9[%c0_23, %c2_24, %c0_25], %53 {strides = array<i32>} : memref<2x20x136xbf16, #tpu.memory_space<vmem>>, vector<2x16x128xbf16>,
    %c0_26 = arith.constant 0 : index
    %c0_27 = arith.constant 0 : index
    %c0_28 = arith.constant 0 : index
    %55 = vector.load %arg9[%c0_26, %c0_27, %c0_28] : memref<2x20x136xbf16, #tpu.memory_space<vmem>>, vector<2x20x136xbf16>
    %56 = vector.extract_strided_slice %55 {offsets = [0, 1, 0], sizes = [2, 16, 136], strides = [1, 1, 1]} : vector<2x20x136xbf16> to vector<2x16x136xbf16>
    %57 = vector.shape_cast %56 : vector<2x16x136xbf16> to vector<32x136xbf16>
    %58 = vector.extract_strided_slice %55 {offsets = [0, 2, 0], sizes = [2, 16, 136], strides = [1, 1, 1]} : vector<2x20x136xbf16> to vector<2x16x136xbf16>
    %59 = vector.shape_cast %58 : vector<2x16x136xbf16> to vector<32x136xbf16>
    %60 = vector.extract_strided_slice %55 {offsets = [0, 3, 0], sizes = [2, 16, 136], strides = [1, 1, 1]} : vector<2x20x136xbf16> to vector<2x16x136xbf16>
    %61 = vector.shape_cast %60 : vector<2x16x136xbf16> to vector<32x136xbf16>
    %62 = tpu.concatenate %57, %59, %61 in 1 : vector<32x136xbf16>, vector<32x136xbf16>, vector<32x136xbf16> -> vector<32x408xbf16>
    %c0_29 = arith.constant 0 : index
    %c0_30 = arith.constant 0 : index
    %63 = vector.load %arg3[%c0_29, %c0_30] : memref<408x128xbf16, #tpu.memory_space<vmem>>, vector<408x128xbf16>
    %cst_31 = arith.constant dense<0.000000e+00> : vector<32x128xf32>
    %64 = tpu.matmul %62, %63, %cst_31 {dimension_numbers = #tpu.dot_dimension_numbers<[1], [0], [0], [1], [0, 0, 1, 1], [], []>} : vector<32x408xbf16>, vector<408x128xbf16>, vector<32x128xf32> -> vector<32x128xf32>
    %c0_32 = arith.constant 0 : index
    %c0_33 = arith.constant 0 : index
    %65 = vector.load %arg6[%c0_32, %c0_33] : memref<1x128xf32, #tpu.memory_space<vmem>>, vector<1x128xf32>
    %c0_34 = arith.constant 0 : index
    %c0_35 = arith.constant 0 : index
    %66 = vector.load %arg7[%c0_34, %c0_35] : memref<1x128xf32, #tpu.memory_space<vmem>>, vector<1x128xf32>
    %cst_36 = arith.constant dense<0.000000e+00> : vector<128xf32>
    %67 = vector.multi_reduction <add>, %64, %cst_36 [0] : vector<32x128xf32> to vector<128xf32>
    %68 = vector.shape_cast %67 : vector<128xf32> to vector<1x128xf32>
    %69 = arith.mulf %64, %64 : vector<32x128xf32>
    %cst_37 = arith.constant dense<0.000000e+00> : vector<128xf32>
    %70 = vector.multi_reduction <add>, %69, %cst_37 [0] : vector<32x128xf32> to vector<128xf32>
    %71 = vector.shape_cast %70 : vector<128xf32> to vector<1x128xf32>
    %72 = tpu.concatenate %68, %71 in 0 : vector<1x128xf32>, vector<1x128xf32> -> vector<2x128xf32>
    %c8_i32_38 = arith.constant 8 : i32
    %73 = tpu.dynamic_rotate %72 by %c8_i32_38 dim 1 : vector<2x128xf32>, i32 -> vector<2x128xf32>
    %74 = arith.addf %72, %73 : vector<2x128xf32>
    %c16_i32_39 = arith.constant 16 : i32
    %75 = tpu.dynamic_rotate %74 by %c16_i32_39 dim 1 : vector<2x128xf32>, i32 -> vector<2x128xf32>
    %76 = arith.addf %74, %75 : vector<2x128xf32>
    %c32_i32_40 = arith.constant 32 : i32
    %77 = tpu.dynamic_rotate %76 by %c32_i32_40 dim 1 : vector<2x128xf32>, i32 -> vector<2x128xf32>
    %78 = arith.addf %76, %77 : vector<2x128xf32>
    %c64_i32_41 = arith.constant 64 : i32
    %79 = tpu.dynamic_rotate %78 by %c64_i32_41 dim 1 : vector<2x128xf32>, i32 -> vector<2x128xf32>
    %80 = arith.addf %78, %79 : vector<2x128xf32>
    %81 = vector.extract_strided_slice %80 {offsets = [0, 0], sizes = [1, 128], strides = [1, 1]} : vector<2x128xf32> to vector<1x128xf32>
    %cst_42 = arith.constant 0.001953125 : f32
    %82 = vector.broadcast %cst_42 : f32 to vector<1x128xf32>
    %83 = arith.mulf %81, %82 : vector<1x128xf32>
    %84 = vector.extract_strided_slice %80 {offsets = [1, 0], sizes = [1, 128], strides = [1, 1]} : vector<2x128xf32> to vector<1x128xf32>
    %cst_43 = arith.constant 0.001953125 : f32
    %85 = vector.broadcast %cst_43 : f32 to vector<1x128xf32>
    %86 = arith.mulf %84, %85 : vector<1x128xf32>
    %87 = arith.mulf %83, %83 : vector<1x128xf32>
    %88 = arith.subf %86, %87 : vector<1x128xf32>
    %89 = vector.broadcast %83 : vector<1x128xf32> to vector<32x128xf32>
    %90 = arith.subf %64, %89 : vector<32x128xf32>
    %cst_44 = arith.constant 9.99999974E-6 : f32
    %91 = vector.broadcast %cst_44 : f32 to vector<1x128xf32>
    %92 = arith.addf %88, %91 : vector<1x128xf32>
    %93 = math.rsqrt %92 : vector<1x128xf32>
    %94 = vector.broadcast %93 : vector<1x128xf32> to vector<32x128xf32>
    %95 = arith.mulf %90, %94 : vector<32x128xf32>
    %96 = vector.broadcast %65 : vector<1x128xf32> to vector<32x128xf32>
    %97 = arith.mulf %95, %96 : vector<32x128xf32>
    %98 = vector.broadcast %66 : vector<1x128xf32> to vector<32x128xf32>
    %99 = arith.addf %97, %98 : vector<32x128xf32>
    %c0_45 = arith.constant 0 : index
    %c0_46 = arith.constant 0 : index
    %c0_47 = arith.constant 0 : index
    %100 = vector.load %arg1[%c0_45, %c0_46, %c0_47] : memref<2x16x128xf32, #tpu.memory_space<vmem>>, vector<2x16x128xf32>
    %101 = vector.shape_cast %100 : vector<2x16x128xf32> to vector<32x128xf32>
    %102 = arith.addf %99, %101 : vector<32x128xf32>
    %cst_48 = arith.constant 0.000000e+00 : f32
    %103 = vector.broadcast %cst_48 : f32 to vector<32x128xf32>
    %104 = arith.maximumf %102, %103 : vector<32x128xf32>
    %105 = vector.shape_cast %104 : vector<32x128xf32> to vector<2x16x128xf32>
    %c0_49 = arith.constant 0 : index
    %c0_50 = arith.constant 0 : index
    %c0_51 = arith.constant 0 : index
    %106 = vector.load %arg8[%c0_49, %c0_50, %c0_51] : memref<2x16x128xf32, #tpu.memory_space<vmem>>, vector<2x16x128xf32>
    tpu.vector_store %arg8[%c0_49, %c0_50, %c0_51], %105 {strides = array<i32>} : memref<2x16x128xf32, #tpu.memory_space<vmem>>, vector<2x16x128xf32>,
    return
  }
  func.func @transform_0(%arg0: i32) -> (i32, i32, i32) {
    %c0_i32 = arith.constant 0 : i32
    %c0_i32_0 = arith.constant 0 : i32
    %c0_i32_1 = arith.constant 0 : i32
    %c0_i32_2 = arith.constant 0 : i32
    return %c0_i32, %c0_i32_0, %c0_i32_1 : i32, i32, i32
  }
  func.func @transform_1(%arg0: i32) -> (i32, i32) {
    %c0_i32 = arith.constant 0 : i32
    %c0_i32_0 = arith.constant 0 : i32
    %c0_i32_1 = arith.constant 0 : i32
    return %c0_i32, %c0_i32_0 : i32, i32
  }
  func.func @transform_2(%arg0: i32) -> (i32, i32) {
    %c0_i32 = arith.constant 0 : i32
    %c0_i32_0 = arith.constant 0 : i32
    %c0_i32_1 = arith.constant 0 : i32
    return %c0_i32, %c0_i32_0 : i32, i32
  }
  func.func @transform_3(%arg0: i32) -> (i32, i32) {
    %c0_i32 = arith.constant 0 : i32
    %c0_i32_0 = arith.constant 0 : i32
    %c0_i32_1 = arith.constant 0 : i32
    return %c0_i32, %c0_i32_0 : i32, i32
  }
  func.func @transform_4(%arg0: i32) -> (i32, i32) {
    %c0_i32 = arith.constant 0 : i32
    %c0_i32_0 = arith.constant 0 : i32
    %c0_i32_1 = arith.constant 0 : i32
    return %c0_i32, %c0_i32_0 : i32, i32
  }
  func.func @transform_5(%arg0: i32) -> (i32, i32) {
    %c0_i32 = arith.constant 0 : i32
    %c0_i32_0 = arith.constant 0 : i32
    %c0_i32_1 = arith.constant 0 : i32
    return %c0_i32, %c0_i32_0 : i32, i32
  }
  func.func @transform_6(%arg0: i32) -> (i32, i32) {
    %c0_i32 = arith.constant 0 : i32
    %c0_i32_0 = arith.constant 0 : i32
    %c0_i32_1 = arith.constant 0 : i32
    return %c0_i32, %c0_i32_0 : i32, i32
  }
  func.func @transform_7(%arg0: i32) -> (i32, i32, i32) {
    %c0_i32 = arith.constant 0 : i32
    %c0_i32_0 = arith.constant 0 : i32
    %c0_i32_1 = arith.constant 0 : i32
    %c0_i32_2 = arith.constant 0 : i32
    return %c0_i32, %c0_i32_0, %c0_i32_1 : i32, i32, i32
  }
}

</mosaic_0001>

<llo_original>
// kernel: basic_block_fused.1
$region0: #{basic_block_fused.1}
  #allocation0 [shape = 'u32[]', space=smem, size = 0x4, offset = 0x4, fixed_abs, tag = 'smem constant byte address 0x4 - core index']
  #allocation1 [shape = 'u32[72,128]{1,0:T(1,128)}', space=vmem, size = 0x9000, scoped, tag = 'internal scratch']
  #allocation2 [shape = 'bf16[2,20,136]{2,1,0:T(8,128)(2,1)}', space=vmem, size = 0x6000, scoped, tag = 'scratch operand']
  %s0 = inlined_call_operand.vmem [shape: f32[2,16,128], index: 0, kind: input, shape index: {}]
  %s1 = inlined_call_operand.vmem [shape: bf16[408,128], index: 1, kind: input, shape index: {}]
  %s2 = inlined_call_operand.vmem [shape: bf16[408,128], index: 2, kind: input, shape index: {}]
  %s3 = inlined_call_operand.vmem [shape: f32[1,128], index: 3, kind: input, shape index: {}]
  %s4 = inlined_call_operand.vmem [shape: f32[1,128], index: 4, kind: input, shape index: {}]
  %s5 = inlined_call_operand.vmem [shape: f32[1,128], index: 5, kind: input, shape index: {}]
  %s6 = inlined_call_operand.vmem [shape: f32[1,128], index: 6, kind: input, shape index: {}]
  %s7 = inlined_call_operand.vmem [shape: f32[2,16,128], index: 7, kind: output, shape index: {}]
  %s8 = sld [smem:[#allocation0]]
  $region38: #{basic_block_fused.1} parent=0
    _
  %s10 = ssub.s32 1, %s8
  %s11 = scalar_select 0, %s10, %s8
  // Predicated region
  $region2: #{basic_block_fused.1} parent=0 // pred_check
    _
  $region3: #{basic_block_fused.1} parent=0 // pred_check_branch
    %13 = sbr.rel (0) target = $region5
  $region4: #{basic_block_fused.1} parent=0 // pred_region
    _
  $region5: #{basic_block_fused.1} parent=0 // pred_fallthru
    _
  // Predicated region
  $region6: #{basic_block_fused.1} parent=0 // pred_check
    _
  $region7: #{basic_block_fused.1} parent=0 // pred_check_branch
    %15 = sbr.rel (0) target = $region9
  $region8: #{basic_block_fused.1} parent=0 // pred_region
    _
  $region9: #{basic_block_fused.1} parent=0 // pred_fallthru
    _
  // Predicated region
  $region10: #{basic_block_fused.1} parent=0 // pred_check
    _
  $region11: #{basic_block_fused.1} parent=0 // pred_check_branch
    %17 = sbr.rel (0) target = $region13
  $region12: #{basic_block_fused.1} parent=0 // pred_region
    _
  $region13: #{basic_block_fused.1} parent=0 // pred_fallthru
    _
  // Predicated region
  $region14: #{basic_block_fused.1} parent=0 // pred_check
    _
  $region15: #{basic_block_fused.1} parent=0 // pred_check_branch
    %19 = sbr.rel (0) target = $region17
  $region16: #{basic_block_fused.1} parent=0 // pred_region
    _
  $region17: #{basic_block_fused.1} parent=0 // pred_fallthru
    _
  // Predicated region
  $region18: #{basic_block_fused.1} parent=0 // pred_check
    _
  $region19: #{basic_block_fused.1} parent=0 // pred_check_branch
    %21 = sbr.rel (0) target = $region21
  $region20: #{basic_block_fused.1} parent=0 // pred_region
    _
  $region21: #{basic_block_fused.1} parent=0 // pred_fallthru
    _
  // Predicated region
  $region22: #{basic_block_fused.1} parent=0 // pred_check
    _
  $region23: #{basic_block_fused.1} parent=0 // pred_check_branch
    %23 = sbr.rel (0) target = $region25
  $region24: #{basic_block_fused.1} parent=0 // pred_region
    _
  $region25: #{basic_block_fused.1} parent=0 // pred_fallthru
    _
  // Predicated region
  $region26: #{basic_block_fused.1} parent=0 // pred_check
    _
  $region27: #{basic_block_fused.1} parent=0 // pred_check_branch
    %25 = sbr.rel (0) target = $region29
  $region28: #{basic_block_fused.1} parent=0 // pred_region
    _
  $region29: #{basic_block_fused.1} parent=0 // pred_fallthru
    _
  %vm27 = vcmask 1043456
  %vm28 = vcmask 64516
  %vm29 = vmor %vm28, %vm27
  %30 = vst.msk [vmem:[#allocation2] sm:$0xff] %vm29, 0
  %31 = vst.msk [vmem:[#allocation2 + $0x8] sm:$0xff] %vm29, 0
  %vm32 = vcmask 1041408
  %vm33 = vcmask 62468
  %vm34 = vmor %vm33, %vm32
  %35 = vst.msk [vmem:[#allocation2 + $0x10] sm:$0x33] %vm34, 0
  %36 = vst.msk [vmem:[#allocation2 + $0x18] sm:$0xff] %vm29, 0
  %37 = vst.msk [vmem:[#allocation2 + $0x20] sm:$0xff] %vm29, 0
  %38 = vst.msk [vmem:[#allocation2 + $0x28] sm:$0x33] %vm34, 0
  %v39 = vld [vmem:[%s0] sm:$0xff]
  %v40 = vld [vmem:[%s0 + $0x8] sm:$0xff]
  %v41 = vld [vmem:[%s0 + $0x10] sm:$0xff]
  %v42 = vld [vmem:[%s0 + $0x18] sm:$0xff]
  %v43 = vpack.c.bf16 %v39, %v39
  %v44 = vpack.c.bf16 %v40, %v40
  %v45 = vpack.c.bf16 %v41, %v41
  %v46 = vpack.c.bf16 %v42, %v42
  %vm51 = vcmask 1040384
  %vm52 = vcmask 1044484
  %vm53 = vmor %vm51, %vm52
  %v54 = vrot.slane %v43, 7
  %v55 = vrot.slane %v54, 4
  %v56 = vrot.slane %v44, 7
  %v57 = vsel %vm53, %v55, %v56
  %v58 = vrot.slane %v56, 4
  %v59 = vrot.slane %v45, 7
  %v60 = vrot.slane %v59, 4
  %v61 = vrot.slane %v46, 7
  %v62 = vsel %vm53, %v60, %v61
  %v63 = vrot.slane %v61, 4
  %70 = vst [vmem:[#allocation2] sm:$0xe] %v54
  %71 = vst [vmem:[#allocation2 + $0x8] sm:$0xf] %v57
  %72 = vst [vmem:[#allocation2 + $0x10] sm:$0x1] %v58
  %73 = vst [vmem:[#allocation2 + $0x18] sm:$0xe] %v59
  %74 = vst [vmem:[#allocation2 + $0x20] sm:$0xf] %v62
  %75 = vst [vmem:[#allocation2 + $0x28] sm:$0x1] %v63
  %v76 = vld [vmem:[#allocation2] sm:$0xff]
  %v77 = vld [vmem:[#allocation2 + $0x8] sm:$0xff]
  %v78 = vld [vmem:[#allocation2 + $0x10] sm:$0x33]
  %v79 = vld [vmem:[#allocation2 + $0x18] sm:$0xff]
  %v80 = vld [vmem:[#allocation2 + $0x20] sm:$0xff]
  %v81 = vld [vmem:[#allocation2 + $0x28] sm:$0x33]
  %vm82 = vsmask.f32 3328
  %vm83 = vsmask.f32 7440
  %vm84 = vmor %vm82, %vm83
  %v86 = vshrl.u32 %v76, 16
  %v88 = vrot.slane %v86, 4
  %v89 = vshll.u32 %v76, 16
  %v91 = vrot.slane %v89, 5
  %v92 = vor.u32 %v88, %v91
  %v93 = vrot.slane %v92, 4
  %v95 = vshll.u32 %v77, 16
  %v97 = vrot.slane %v95, 5
  %v98 = vsel %vm84, %v93, %v97
  %v99 = vshrl.u32 %v77, 16
  %v101 = vrot.slane %v99, 4
  %v102 = vor.u32 %v101, %v97
  %v103 = vrot.slane %v102, 4
  %v105 = vshll.u32 %v78, 16
  %v107 = vrot.slane %v105, 5
  %v108 = vsel %vm84, %v103, %v107
  %v110 = vshrl.u32 %v79, 16
  %v112 = vrot.slane %v110, 4
  %v113 = vshll.u32 %v79, 16
  %v115 = vrot.slane %v113, 5
  %v116 = vor.u32 %v112, %v115
  %v117 = vrot.slane %v116, 4
  %v119 = vshll.u32 %v80, 16
  %v121 = vrot.slane %v119, 5
  %v122 = vsel %vm84, %v117, %v121
  %v123 = vshrl.u32 %v80, 16
  %v125 = vrot.slane %v123, 4
  %v126 = vor.u32 %v125, %v121
  %v127 = vrot.slane %v126, 4
  %v129 = vshll.u32 %v81, 16
  %v131 = vrot.slane %v129, 5
  %v132 = vsel %vm84, %v127, %v131
  %vm139 = vcmask 1042432
  %vm140 = vcmask 1046532
  %vm141 = vmor %vm139, %vm140
  %v142 = vrot.slane %v76, 5
  %v143 = vrot.slane %v142, 4
  %v144 = vrot.slane %v77, 5
  %v145 = vsel %vm141, %v143, %v144
  %v146 = vrot.slane %v144, 4
  %v147 = vrot.slane %v78, 5
  %v148 = vsel %vm141, %v146, %v147
  %v149 = vrot.slane %v79, 5
  %v150 = vrot.slane %v149, 4
  %v151 = vrot.slane %v80, 5
  %v152 = vsel %vm141, %v150, %v151
  %v153 = vrot.slane %v151, 4
  %v154 = vrot.slane %v81, 5
  %v155 = vsel %vm141, %v153, %v154
  %vm156 = vsmask.f32 2304
  %vm157 = vsmask.f32 6416
  %vm158 = vmor %vm156, %vm157
  %v159 = vrot.slane %v86, 5
  %v160 = vrot.slane %v89, 6
  %v161 = vor.u32 %v159, %v160
  %v162 = vrot.slane %v161, 4
  %v163 = vrot.slane %v99, 5
  %v164 = vrot.slane %v95, 6
  %v165 = vor.u32 %v163, %v164
  %v166 = vsel %vm158, %v162, %v165
  %v167 = vrot.slane %v165, 4
  %v168 = vshrl.u32 %v78, 16
  %v170 = vrot.slane %v168, 5
  %v171 = vrot.slane %v105, 6
  %v172 = vor.u32 %v170, %v171
  %v173 = vsel %vm158, %v167, %v172
  %v174 = vrot.slane %v110, 5
  %v175 = vrot.slane %v113, 6
  %v176 = vor.u32 %v174, %v175
  %v177 = vrot.slane %v176, 4
  %v178 = vrot.slane %v123, 5
  %v179 = vrot.slane %v119, 6
  %v180 = vor.u32 %v178, %v179
  %v181 = vsel %vm158, %v177, %v180
  %v182 = vrot.slane %v180, 4
  %v183 = vshrl.u32 %v81, 16
  %v185 = vrot.slane %v183, 5
  %v186 = vrot.slane %v129, 6
  %v187 = vor.u32 %v185, %v186
  %v188 = vsel %vm158, %v182, %v187
  %v189 = vunpack.c.l.b16 %v98
  %v190 = vunpack.c.h.b16 %v98
  %v191 = vunpack.c.l.b16 %v108
  %v192 = vunpack.c.h.b16 %v108
  %v193 = vunpack.c.l.b16 %v122
  %v194 = vunpack.c.h.b16 %v122
  %v195 = vunpack.c.l.b16 %v132
  %v196 = vunpack.c.h.b16 %v132
  %v197 = vpack.c.b16 %v191, %v189
  %v198 = vpack.c.b16 %v192, %v190
  %v199 = vpack.c.b16 %v195, %v193
  %v200 = vpack.c.b16 %v196, %v194
  %v203 = vunpack.c.l.b16 %v145
  %v204 = vunpack.c.h.b16 %v145
  %v205 = vunpack.c.l.b16 %v148
  %v206 = vunpack.c.h.b16 %v148
  %v207 = vunpack.c.l.b16 %v152
  %v208 = vunpack.c.h.b16 %v152
  %v209 = vunpack.c.l.b16 %v155
  %v210 = vunpack.c.h.b16 %v155
  %v211 = vpack.c.b16 %v205, %v203
  %v212 = vpack.c.b16 %v206, %v204
  %v213 = vpack.c.b16 %v209, %v207
  %v214 = vpack.c.b16 %v210, %v208
  %215 = vrot.lane.b32.xlu0 %v211, 8
  %v216 = vpop.permute.xlu0 %215
  %217 = vrot.lane.b32.xlu0 %v212, 8
  %v218 = vpop.permute.xlu0 %217
  %219 = vrot.lane.b32.xlu0 %v213, 8
  %v220 = vpop.permute.xlu0 %219
  %221 = vrot.lane.b32.xlu0 %v214, 8
  %v222 = vpop.permute.xlu0 %221
  %vm223 = vcmask 64512
  %v224 = vsel %vm223, %v216, %v218
  %v225 = vsel %vm223, %v220, %v222
  %v226 = vunpack.c.l.b16 %v166
  %v227 = vunpack.c.h.b16 %v166
  %v228 = vunpack.c.l.b16 %v173
  %v229 = vunpack.c.h.b16 %v173
  %v230 = vunpack.c.l.b16 %v181
  %v231 = vunpack.c.h.b16 %v181
  %v232 = vunpack.c.l.b16 %v188
  %v233 = vunpack.c.h.b16 %v188
  %v234 = vpack.c.b16 %v228, %v226
  %v235 = vpack.c.b16 %v229, %v227
  %v236 = vpack.c.b16 %v232, %v230
  %v237 = vpack.c.b16 %v233, %v231
  %238 = vrot.lane.b32.xlu0 %v234, 16
  %v239 = vpop.permute.xlu0 %238
  %240 = vrot.lane.b32.xlu0 %v235, 16
  %v241 = vpop.permute.xlu0 %240
  %242 = vrot.lane.b32.xlu0 %v236, 16
  %v243 = vpop.permute.xlu0 %242
  %244 = vrot.lane.b32.xlu0 %v237, 16
  %v245 = vpop.permute.xlu0 %244
  %vm246 = vcmask 130048
  %v247 = vsel %vm246, %v239, %v241
  %v248 = vsel %vm246, %v243, %v245
  %vm249 = vcmask 64512
  %v252 = vsel %vm249, %v198, %v216
  %v256 = vsel %vm249, %v200, %v220
  %vm258 = vcmask 130048
  %v261 = vsel %vm258, %v224, %v239
  %v265 = vsel %vm258, %v225, %v243
  %v267 = vld [vmem:[%s1] sm:$0xf]
  %v268 = vld [vmem:[%s1 + $0x4] sm:$0xf]
  %v269 = vld [vmem:[%s1 + $0x8] sm:$0xf]
  %v270 = vld [vmem:[%s1 + $0xc] sm:$0xf]
  %v271 = vld [vmem:[%s1 + $0x10] sm:$0xf]
  %v272 = vld [vmem:[%s1 + $0x14] sm:$0xf]
  %v273 = vld [vmem:[%s1 + $0x18] sm:$0xf]
  %v274 = vld [vmem:[%s1 + $0x1c] sm:$0xf]
  %v275 = vld [vmem:[%s1 + $0x20] sm:$0xf]
  %v276 = vld [vmem:[%s1 + $0x24] sm:$0xf]
  %v277 = vld [vmem:[%s1 + $0x28] sm:$0xf]
  %v278 = vld [vmem:[%s1 + $0x2c] sm:$0xf]
  %v279 = vld [vmem:[%s1 + $0x30] sm:$0xf]
  %v280 = vld [vmem:[%s1 + $0x34] sm:$0xf]
  %v281 = vld [vmem:[%s1 + $0x38] sm:$0xf]
  %v282 = vld [vmem:[%s1 + $0x3c] sm:$0xf]
  %v283 = vld [vmem:[%s1 + $0x40] sm:$0xf]
  %v284 = vld [vmem:[%s1 + $0x44] sm:$0xf]
  %v285 = vld [vmem:[%s1 + $0x48] sm:$0xf]
  %v286 = vld [vmem:[%s1 + $0x4c] sm:$0xf]
  %v287 = vld [vmem:[%s1 + $0x50] sm:$0xf]
  %v288 = vld [vmem:[%s1 + $0x54] sm:$0xf]
  %v289 = vld [vmem:[%s1 + $0x58] sm:$0xf]
  %v290 = vld [vmem:[%s1 + $0x5c] sm:$0xf]
  %v291 = vld [vmem:[%s1 + $0x60] sm:$0xf]
  %v292 = vld [vmem:[%s1 + $0x64] sm:$0xf]
  %v293 = vld [vmem:[%s1 + $0x68] sm:$0xf]
  %v294 = vld [vmem:[%s1 + $0x6c] sm:$0xf]
  %v295 = vld [vmem:[%s1 + $0x70] sm:$0xf]
  %v296 = vld [vmem:[%s1 + $0x74] sm:$0xf]
  %v297 = vld [vmem:[%s1 + $0x78] sm:$0xf]
  %v298 = vld [vmem:[%s1 + $0x7c] sm:$0xf]
  %v299 = vld [vmem:[%s1 + $0x80] sm:$0xf]
  %v300 = vld [vmem:[%s1 + $0x84] sm:$0xf]
  %v301 = vld [vmem:[%s1 + $0x88] sm:$0xf]
  %v302 = vld [vmem:[%s1 + $0x8c] sm:$0xf]
  %v303 = vld [vmem:[%s1 + $0x90] sm:$0xf]
  %v304 = vld [vmem:[%s1 + $0x94] sm:$0xf]
  %v305 = vld [vmem:[%s1 + $0x98] sm:$0xf]
  %v306 = vld [vmem:[%s1 + $0x9c] sm:$0xf]
  %v307 = vld [vmem:[%s1 + $0xa0] sm:$0xf]
  %v308 = vld [vmem:[%s1 + $0xa4] sm:$0xf]
  %v309 = vld [vmem:[%s1 + $0xa8] sm:$0xf]
  %v310 = vld [vmem:[%s1 + $0xac] sm:$0xf]
  %v311 = vld [vmem:[%s1 + $0xb0] sm:$0xf]
  %v312 = vld [vmem:[%s1 + $0xb4] sm:$0xf]
  %v313 = vld [vmem:[%s1 + $0xb8] sm:$0xf]
  %v314 = vld [vmem:[%s1 + $0xbc] sm:$0xf]
  %v315 = vld [vmem:[%s1 + $0xc0] sm:$0xf]
  %v316 = vld [vmem:[%s1 + $0xc4] sm:$0xf]
  %v317 = vld [vmem:[%s1 + $0xc8] sm:$0xf]
  %v369 = vunpack.c.l.b16 %v267
  %v370 = vunpack.c.l.b16 %v268
  %v371 = vunpack.c.l.b16 %v269
  %v372 = vunpack.c.l.b16 %v270
  %v373 = vunpack.c.l.b16 %v271
  %v374 = vunpack.c.l.b16 %v272
  %v375 = vunpack.c.l.b16 %v273
  %v376 = vunpack.c.l.b16 %v274
  %v377 = vunpack.c.l.b16 %v275
  %v378 = vunpack.c.l.b16 %v276
  %v379 = vunpack.c.l.b16 %v277
  %v380 = vunpack.c.l.b16 %v278
  %v381 = vunpack.c.l.b16 %v279
  %v382 = vunpack.c.l.b16 %v280
  %v383 = vunpack.c.l.b16 %v281
  %v384 = vunpack.c.l.b16 %v282
  %v385 = vunpack.c.l.b16 %v283
  %v386 = vunpack.c.l.b16 %v284
  %v387 = vunpack.c.l.b16 %v285
  %v388 = vunpack.c.l.b16 %v286
  %v389 = vunpack.c.l.b16 %v287
  %v390 = vunpack.c.l.b16 %v288
  %v391 = vunpack.c.l.b16 %v289
  %v392 = vunpack.c.l.b16 %v290
  %v393 = vunpack.c.l.b16 %v291
  %v394 = vunpack.c.l.b16 %v292
  %v395 = vunpack.c.l.b16 %v293
  %v396 = vunpack.c.l.b16 %v294
  %v397 = vunpack.c.l.b16 %v295
  %v398 = vunpack.c.l.b16 %v296
  %v399 = vunpack.c.l.b16 %v297
  %v400 = vunpack.c.l.b16 %v298
  %v401 = vunpack.c.l.b16 %v299
  %v402 = vunpack.c.l.b16 %v300
  %v403 = vunpack.c.l.b16 %v301
  %v404 = vunpack.c.l.b16 %v302
  %v405 = vunpack.c.l.b16 %v303
  %v406 = vunpack.c.l.b16 %v304
  %v407 = vunpack.c.l.b16 %v305
  %v408 = vunpack.c.l.b16 %v306
  %v409 = vunpack.c.l.b16 %v307
  %v410 = vunpack.c.l.b16 %v308
  %v411 = vunpack.c.l.b16 %v309
  %v412 = vunpack.c.l.b16 %v310
  %v413 = vunpack.c.l.b16 %v311
  %v414 = vunpack.c.l.b16 %v312
  %v415 = vunpack.c.l.b16 %v313
  %v416 = vunpack.c.l.b16 %v314
  %v417 = vunpack.c.l.b16 %v315
  %v418 = vunpack.c.l.b16 %v316
  %v419 = vunpack.c.l.b16 %v317
  %v420 = vpack.c.b16 %v370, %v369
  %v421 = vpack.c.b16 %v372, %v371
  %v422 = vpack.c.b16 %v374, %v373
  %v423 = vpack.c.b16 %v376, %v375
  %v424 = vpack.c.b16 %v378, %v377
  %v425 = vpack.c.b16 %v380, %v379
  %v426 = vpack.c.b16 %v382, %v381
  %v427 = vpack.c.b16 %v384, %v383
  %v428 = vpack.c.b16 %v386, %v385
  %v429 = vpack.c.b16 %v388, %v387
  %v430 = vpack.c.b16 %v390, %v389
  %v431 = vpack.c.b16 %v392, %v391
  %v432 = vpack.c.b16 %v394, %v393
  %v433 = vpack.c.b16 %v396, %v395
  %v434 = vpack.c.b16 %v398, %v397
  %v435 = vpack.c.b16 %v400, %v399
  %v436 = vpack.c.b16 %v402, %v401
  %v437 = vpack.c.b16 %v404, %v403
  %v438 = vpack.c.b16 %v406, %v405
  %v439 = vpack.c.b16 %v408, %v407
  %v440 = vpack.c.b16 %v410, %v409
  %v441 = vpack.c.b16 %v412, %v411
  %v442 = vpack.c.b16 %v414, %v413
  %v443 = vpack.c.b16 %v416, %v415
  %v444 = vpack.c.b16 %v418, %v417
  %v445 = vpack.c.b16 %v419, %v419
  %vm471 = vcmask 195584
  %v473 = vsel %vm471, %v247, 0
  %v476 = vsel %vm471, %v248, 0
  %v479 = vsel %vm27, %v445, 0
  %481 = vmatpush.bf16.msra.mxu0 %v427
  %482 = vmatpush.bf16.msra.mxu0 %v426
  %483 = vmatpush.bf16.msra.mxu0 %v425
  %484 = vmatpush.bf16.msra.mxu0 %v424
  %485 = vmatpush.bf16.msra.mxu0 %v423
  %486 = vmatpush.bf16.msra.mxu0 %v422
  %487 = vmatpush.bf16.msra.mxu0 %v421
  %488 = vmatpush.bf16.msra.mxu0 %v420
  %489 = vmatmul.bf16.gmra.mxu0 %v197
  %v490 = vpop.f32.mrf.mxu0
  %v491 = vadd.f32 0.0, %v490
  %v492 = vpop.f32.mrf.mxu0
  %v493 = vadd.f32 0.0, %v492
  %494 = vmatmul.bf16.gmra.mxu0 %v199
  %v495 = vpop.f32.mrf.mxu0
  %v496 = vadd.f32 0.0, %v495
  %v497 = vpop.f32.mrf.mxu0
  %v498 = vadd.f32 0.0, %v497
  %499 = vdwg.mxu0
  %500 = vmatpush.bf16.msra.mxu0 %v435
  %501 = vmatpush.bf16.msra.mxu0 %v434
  %502 = vmatpush.bf16.msra.mxu0 %v433
  %503 = vmatpush.bf16.msra.mxu0 %v432
  %504 = vmatpush.bf16.msra.mxu0 %v431
  %505 = vmatpush.bf16.msra.mxu0 %v430
  %506 = vmatpush.bf16.msra.mxu0 %v429
  %507 = vmatpush.bf16.msra.mxu0 %v428
  %508 = vmatmul.bf16.gmra.mxu0 %v252
  %v509 = vpop.f32.mrf.mxu0
  %v510 = vadd.f32 %v491, %v509
  %v511 = vpop.f32.mrf.mxu0
  %v512 = vadd.f32 %v493, %v511
  %513 = vmatmul.bf16.gmra.mxu0 %v256
  %v514 = vpop.f32.mrf.mxu0
  %v515 = vadd.f32 %v496, %v514
  %v516 = vpop.f32.mrf.mxu0
  %v517 = vadd.f32 %v498, %v516
  %518 = vdwg.mxu0
  %519 = vmatpush.bf16.msra.mxu0 %v443
  %520 = vmatpush.bf16.msra.mxu0 %v442
  %521 = vmatpush.bf16.msra.mxu0 %v441
  %522 = vmatpush.bf16.msra.mxu0 %v440
  %523 = vmatpush.bf16.msra.mxu0 %v439
  %524 = vmatpush.bf16.msra.mxu0 %v438
  %525 = vmatpush.bf16.msra.mxu0 %v437
  %526 = vmatpush.bf16.msra.mxu0 %v436
  %527 = vmatmul.bf16.gmra.mxu0 %v261
  %v528 = vpop.f32.mrf.mxu0
  %v529 = vadd.f32 %v510, %v528
  %v530 = vpop.f32.mrf.mxu0
  %v531 = vadd.f32 %v512, %v530
  %532 = vmatmul.bf16.gmra.mxu0 %v265
  %v533 = vpop.f32.mrf.mxu0
  %v534 = vadd.f32 %v515, %v533
  %v535 = vpop.f32.mrf.mxu0
  %v536 = vadd.f32 %v517, %v535
  %537 = vdwg.mxu0
  %538 = vmatpush.bf16.msra.mxu0 0
  %539 = vmatpush.bf16.msra.mxu0 0
  %540 = vmatpush.bf16.msra.mxu0 0
  %541 = vmatpush.bf16.msra.mxu0 0
  %542 = vmatpush.bf16.msra.mxu0 0
  %543 = vmatpush.bf16.msra.mxu0 0
  %544 = vmatpush.bf16.msra.mxu0 %v479
  %545 = vmatpush.bf16.msra.mxu0 %v444
  %546 = vmatmul.bf16.gmra.mxu0 %v473
  %v547 = vpop.f32.mrf.mxu0
  %v548 = vadd.f32 %v529, %v547
  %v549 = vpop.f32.mrf.mxu0
  %v550 = vadd.f32 %v531, %v549
  %551 = vmatmul.bf16.gmra.mxu0 %v476
  %v552 = vpop.f32.mrf.mxu0
  %v553 = vadd.f32 %v534, %v552
  %v554 = vpop.f32.mrf.mxu0
  %v555 = vadd.f32 %v536, %v554
  %556 = vdwg.mxu0
  %v557 = vld [vmem:[%s3] sm:$0x1]
  %v558 = vld [vmem:[%s4] sm:$0x1]
  %v559 = vadd.f32 %v548, %v550
  %v560 = vadd.f32 %v559, %v553
  %v561 = vadd.f32 %v560, %v555
  %v562 = vrot.slane %v561, 4
  %v563 = vadd.f32 %v561, %v562
  %v564 = vrot.slane %v563, 2
  %v565 = vadd.f32 %v563, %v564
  %v566 = vrot.slane %v565, 1
  %v567 = vadd.f32 %v565, %v566
  %v568 = vmul.f32 %v548, %v548
  %v569 = vmul.f32 %v550, %v550
  %v570 = vmul.f32 %v553, %v553
  %v571 = vmul.f32 %v555, %v555
  %v572 = vadd.f32 %v568, %v569
  %v573 = vadd.f32 %v572, %v570
  %v574 = vadd.f32 %v573, %v571
  %v575 = vrot.slane %v574, 4
  %v576 = vadd.f32 %v574, %v575
  %v577 = vrot.slane %v576, 2
  %v578 = vadd.f32 %v576, %v577
  %v579 = vrot.slane %v578, 1
  %v580 = vadd.f32 %v578, %v579
  %vm581 = vcmask 1040384
  %v582 = vsel %vm581, %v567, %v580
  %583 = vrot.lane.b32.xlu0 %v582, 8
  %v584 = vpop.permute.xlu0 %583
  %v585 = vadd.f32 %v582, %v584
  %586 = vrot.lane.b32.xlu0 %v585, 16
  %v587 = vpop.permute.xlu0 %586
  %v588 = vadd.f32 %v585, %v587
  %589 = vrot.lane.b32.xlu0 %v588, 32
  %v590 = vpop.permute.xlu0 %589
  %v591 = vadd.f32 %v588, %v590
  %592 = vrot.lane.b32.xlu0 %v591, 64
  %v593 = vpop.permute.xlu0 %592
  %v594 = vadd.f32 %v591, %v593
  %v595 = vmul.f32 %v594, 0.001953125
  %v596 = vmul.f32 %v595, %v595
  %v598 = vrot.slane %v596, 7
  %v600 = vsub.f32 %v595, %v598
  %v601 = vperm.slane %v595, 0
  %v602 = vsub.f32 %v548, %v601
  %v603 = vsub.f32 %v550, %v601
  %v604 = vsub.f32 %v553, %v601
  %v605 = vsub.f32 %v555, %v601
  %v606 = vadd.f32 %v600, 1e-05
  %v607 = vrsqrt.pop %v606
  %v608 = vmul.f32 %v607, %v606
  %v609 = vmul.f32 %v608, %v607
  %v610 = vmul.f32 0.5, %v609
  %v611 = vsub.f32 1.5, %v610
  %v612 = vmul.f32 %v607, %v611
  %vm613 = vweird.f32 %v606
  %vm614 = vweird.f32 %v607
  %vm615 = vmor %vm613, %vm614
  %v616 = vsel %vm615, %v607, %v612
  %v617 = vperm.slane %v616, 1
  %v618 = vmul.f32 %v602, %v617
  %v619 = vmul.f32 %v603, %v617
  %v620 = vmul.f32 %v604, %v617
  %v621 = vmul.f32 %v605, %v617
  %v623 = vperm.slane %v557, 0
  %v625 = vmul.f32 %v618, %v623
  %v626 = vmul.f32 %v619, %v623
  %v627 = vmul.f32 %v620, %v623
  %v628 = vmul.f32 %v621, %v623
  %v630 = vperm.slane %v558, 0
  %v632 = vadd.f32 %v625, %v630
  %v633 = vadd.f32 %v626, %v630
  %v634 = vadd.f32 %v627, %v630
  %v635 = vadd.f32 %v628, %v630
  %v636 = vmax.f32 %v632, 0.0
  %v637 = vmax.f32 %v633, 0.0
  %v638 = vmax.f32 %v634, 0.0
  %v639 = vmax.f32 %v635, 0.0
  %v640 = vpack.c.bf16 %v636, %v636
  %v641 = vpack.c.bf16 %v637, %v637
  %v642 = vpack.c.bf16 %v638, %v638
  %v643 = vpack.c.bf16 %v639, %v639
  %v648 = vrot.slane %v640, 7
  %v649 = vrot.slane %v648, 4
  %v650 = vrot.slane %v641, 7
  %v651 = vsel %vm53, %v649, %v650
  %v652 = vrot.slane %v650, 4
  %v653 = vrot.slane %v642, 7
  %v654 = vrot.slane %v653, 4
  %v655 = vrot.slane %v643, 7
  %v656 = vsel %vm53, %v654, %v655
  %v657 = vrot.slane %v655, 4
  %664 = vst [vmem:[#allocation2] sm:$0xe] %v648
  %665 = vst [vmem:[#allocation2 + $0x8] sm:$0xf] %v651
  %666 = vst [vmem:[#allocation2 + $0x10] sm:$0x1] %v652
  %667 = vst [vmem:[#allocation2 + $0x18] sm:$0xe] %v653
  %668 = vst [vmem:[#allocation2 + $0x20] sm:$0xf] %v656
  %669 = vst [vmem:[#allocation2 + $0x28] sm:$0x1] %v657
  %v670 = vld [vmem:[#allocation2] sm:$0xff]
  %v671 = vld [vmem:[#allocation2 + $0x8] sm:$0xff]
  %v672 = vld [vmem:[#allocation2 + $0x10] sm:$0x33]
  %v673 = vld [vmem:[#allocation2 + $0x18] sm:$0xff]
  %v674 = vld [vmem:[#allocation2 + $0x20] sm:$0xff]
  %v675 = vld [vmem:[#allocation2 + $0x28] sm:$0x33]
  %v677 = vshrl.u32 %v670, 16
  %v679 = vrot.slane %v677, 4
  %v680 = vshll.u32 %v670, 16
  %v682 = vrot.slane %v680, 5
  %v683 = vor.u32 %v679, %v682
  %v684 = vrot.slane %v683, 4
  %v686 = vshll.u32 %v671, 16
  %v688 = vrot.slane %v686, 5
  %v689 = vsel %vm84, %v684, %v688
  %v690 = vshrl.u32 %v671, 16
  %v692 = vrot.slane %v690, 4
  %v693 = vor.u32 %v692, %v688
  %v694 = vrot.slane %v693, 4
  %v696 = vshll.u32 %v672, 16
  %v698 = vrot.slane %v696, 5
  %v699 = vsel %vm84, %v694, %v698
  %v701 = vshrl.u32 %v673, 16
  %v703 = vrot.slane %v701, 4
  %v704 = vshll.u32 %v673, 16
  %v706 = vrot.slane %v704, 5
  %v707 = vor.u32 %v703, %v706
  %v708 = vrot.slane %v707, 4
  %v710 = vshll.u32 %v674, 16
  %v712 = vrot.slane %v710, 5
  %v713 = vsel %vm84, %v708, %v712
  %v714 = vshrl.u32 %v674, 16
  %v716 = vrot.slane %v714, 4
  %v717 = vor.u32 %v716, %v712
  %v718 = vrot.slane %v717, 4
  %v720 = vshll.u32 %v675, 16
  %v722 = vrot.slane %v720, 5
  %v723 = vsel %vm84, %v718, %v722
  %v730 = vrot.slane %v670, 5
  %v731 = vrot.slane %v730, 4
  %v732 = vrot.slane %v671, 5
  %v733 = vsel %vm141, %v731, %v732
  %v734 = vrot.slane %v732, 4
  %v735 = vrot.slane %v672, 5
  %v736 = vsel %vm141, %v734, %v735
  %v737 = vrot.slane %v673, 5
  %v738 = vrot.slane %v737, 4
  %v739 = vrot.slane %v674, 5
  %v740 = vsel %vm141, %v738, %v739
  %v741 = vrot.slane %v739, 4
  %v742 = vrot.slane %v675, 5
  %v743 = vsel %vm141, %v741, %v742
  %v744 = vrot.slane %v677, 5
  %v745 = vrot.slane %v680, 6
  %v746 = vor.u32 %v744, %v745
  %v747 = vrot.slane %v746, 4
  %v748 = vrot.slane %v690, 5
  %v749 = vrot.slane %v686, 6
  %v750 = vor.u32 %v748, %v749
  %v751 = vsel %vm158, %v747, %v750
  %v752 = vrot.slane %v750, 4
  %v753 = vshrl.u32 %v672, 16
  %v755 = vrot.slane %v753, 5
  %v756 = vrot.slane %v696, 6
  %v757 = vor.u32 %v755, %v756
  %v758 = vsel %vm158, %v752, %v757
  %v759 = vrot.slane %v701, 5
  %v760 = vrot.slane %v704, 6
  %v761 = vor.u32 %v759, %v760
  %v762 = vrot.slane %v761, 4
  %v763 = vrot.slane %v714, 5
  %v764 = vrot.slane %v710, 6
  %v765 = vor.u32 %v763, %v764
  %v766 = vsel %vm158, %v762, %v765
  %v767 = vrot.slane %v765, 4
  %v768 = vshrl.u32 %v675, 16
  %v770 = vrot.slane %v768, 5
  %v771 = vrot.slane %v720, 6
  %v772 = vor.u32 %v770, %v771
  %v773 = vsel %vm158, %v767, %v772
  %v774 = vunpack.c.l.b16 %v689
  %v775 = vunpack.c.h.b16 %v689
  %v776 = vunpack.c.l.b16 %v699
  %v777 = vunpack.c.h.b16 %v699
  %v778 = vunpack.c.l.b16 %v713
  %v779 = vunpack.c.h.b16 %v713
  %v780 = vunpack.c.l.b16 %v723
  %v781 = vunpack.c.h.b16 %v723
  %v782 = vpack.c.b16 %v776, %v774
  %v783 = vpack.c.b16 %v777, %v775
  %v784 = vpack.c.b16 %v780, %v778
  %v785 = vpack.c.b16 %v781, %v779
  %v788 = vunpack.c.l.b16 %v733
  %v789 = vunpack.c.h.b16 %v733
  %v790 = vunpack.c.l.b16 %v736
  %v791 = vunpack.c.h.b16 %v736
  %v792 = vunpack.c.l.b16 %v740
  %v793 = vunpack.c.h.b16 %v740
  %v794 = vunpack.c.l.b16 %v743
  %v795 = vunpack.c.h.b16 %v743
  %v796 = vpack.c.b16 %v790, %v788
  %v797 = vpack.c.b16 %v791, %v789
  %v798 = vpack.c.b16 %v794, %v792
  %v799 = vpack.c.b16 %v795, %v793
  %800 = vrot.lane.b32.xlu0 %v796, 8
  %v801 = vpop.permute.xlu0 %800
  %802 = vrot.lane.b32.xlu0 %v797, 8
  %v803 = vpop.permute.xlu0 %802
  %804 = vrot.lane.b32.xlu0 %v798, 8
  %v805 = vpop.permute.xlu0 %804
  %806 = vrot.lane.b32.xlu0 %v799, 8
  %v807 = vpop.permute.xlu0 %806
  %v808 = vsel %vm223, %v801, %v803
  %v809 = vsel %vm223, %v805, %v807
  %v810 = vunpack.c.l.b16 %v751
  %v811 = vunpack.c.h.b16 %v751
  %v812 = vunpack.c.l.b16 %v758
  %v813 = vunpack.c.h.b16 %v758
  %v814 = vunpack.c.l.b16 %v766
  %v815 = vunpack.c.h.b16 %v766
  %v816 = vunpack.c.l.b16 %v773
  %v817 = vunpack.c.h.b16 %v773
  %v818 = vpack.c.b16 %v812, %v810
  %v819 = vpack.c.b16 %v813, %v811
  %v820 = vpack.c.b16 %v816, %v814
  %v821 = vpack.c.b16 %v817, %v815
  %822 = vrot.lane.b32.xlu0 %v818, 16
  %v823 = vpop.permute.xlu0 %822
  %824 = vrot.lane.b32.xlu0 %v819, 16
  %v825 = vpop.permute.xlu0 %824
  %826 = vrot.lane.b32.xlu0 %v820, 16
  %v827 = vpop.permute.xlu0 %826
  %828 = vrot.lane.b32.xlu0 %v821, 16
  %v829 = vpop.permute.xlu0 %828
  %v830 = vsel %vm246, %v823, %v825
  %v831 = vsel %vm246, %v827, %v829
  %v834 = vsel %vm249, %v783, %v801
  %v838 = vsel %vm249, %v785, %v805
  %v842 = vsel %vm258, %v808, %v823
  %v846 = vsel %vm258, %v809, %v827
  %v848 = vld [vmem:[%s2] sm:$0xf]
  %v849 = vld [vmem:[%s2 + $0x4] sm:$0xf]
  %v850 = vld [vmem:[%s2 + $0x8] sm:$0xf]
  %v851 = vld [vmem:[%s2 + $0xc] sm:$0xf]
  %v852 = vld [vmem:[%s2 + $0x10] sm:$0xf]
  %v853 = vld [vmem:[%s2 + $0x14] sm:$0xf]
  %v854 = vld [vmem:[%s2 + $0x18] sm:$0xf]
  %v855 = vld [vmem:[%s2 + $0x1c] sm:$0xf]
  %v856 = vld [vmem:[%s2 + $0x20] sm:$0xf]
  %v857 = vld [vmem:[%s2 + $0x24] sm:$0xf]
  %v858 = vld [vmem:[%s2 + $0x28] sm:$0xf]
  %v859 = vld [vmem:[%s2 + $0x2c] sm:$0xf]
  %v860 = vld [vmem:[%s2 + $0x30] sm:$0xf]
  %v861 = vld [vmem:[%s2 + $0x34] sm:$0xf]
  %v862 = vld [vmem:[%s2 + $0x38] sm:$0xf]
  %v863 = vld [vmem:[%s2 + $0x3c] sm:$0xf]
  %v864 = vld [vmem:[%s2 + $0x40] sm:$0xf]
  %v865 = vld [vmem:[%s2 + $0x44] sm:$0xf]
  %v866 = vld [vmem:[%s2 + $0x48] sm:$0xf]
  %v867 = vld [vmem:[%s2 + $0x4c] sm:$0xf]
  %v868 = vld [vmem:[%s2 + $0x50] sm:$0xf]
  %v869 = vld [vmem:[%s2 + $0x54] sm:$0xf]
  %v870 = vld [vmem:[%s2 + $0x58] sm:$0xf]
  %v871 = vld [vmem:[%s2 + $0x5c] sm:$0xf]
  %v872 = vld [vmem:[%s2 + $0x60] sm:$0xf]
  %v873 = vld [vmem:[%s2 + $0x64] sm:$0xf]
  %v874 = vld [vmem:[%s2 + $0x68] sm:$0xf]
  %v875 = vld [vmem:[%s2 + $0x6c] sm:$0xf]
  %v876 = vld [vmem:[%s2 + $0x70] sm:$0xf]
  %v877 = vld [vmem:[%s2 + $0x74] sm:$0xf]
  %v878 = vld [vmem:[%s2 + $0x78] sm:$0xf]
  %v879 = vld [vmem:[%s2 + $0x7c] sm:$0xf]
  %v880 = vld [vmem:[%s2 + $0x80] sm:$0xf]
  %v881 = vld [vmem:[%s2 + $0x84] sm:$0xf]
  %v882 = vld [vmem:[%s2 + $0x88] sm:$0xf]
  %v883 = vld [vmem:[%s2 + $0x8c] sm:$0xf]
  %v884 = vld [vmem:[%s2 + $0x90] sm:$0xf]
  %v885 = vld [vmem:[%s2 + $0x94] sm:$0xf]
  %v886 = vld [vmem:[%s2 + $0x98] sm:$0xf]
  %v887 = vld [vmem:[%s2 + $0x9c] sm:$0xf]
  %v888 = vld [vmem:[%s2 + $0xa0] sm:$0xf]
  %v889 = vld [vmem:[%s2 + $0xa4] sm:$0xf]
  %v890 = vld [vmem:[%s2 + $0xa8] sm:$0xf]
  %v891 = vld [vmem:[%s2 + $0xac] sm:$0xf]
  %v892 = vld [vmem:[%s2 + $0xb0] sm:$0xf]
  %v893 = vld [vmem:[%s2 + $0xb4] sm:$0xf]
  %v894 = vld [vmem:[%s2 + $0xb8] sm:$0xf]
  %v895 = vld [vmem:[%s2 + $0xbc] sm:$0xf]
  %v896 = vld [vmem:[%s2 + $0xc0] sm:$0xf]
  %v897 = vld [vmem:[%s2 + $0xc4] sm:$0xf]
  %v898 = vld [vmem:[%s2 + $0xc8] sm:$0xf]
  %v950 = vunpack.c.l.b16 %v848
  %v951 = vunpack.c.l.b16 %v849
  %v952 = vunpack.c.l.b16 %v850
  %v953 = vunpack.c.l.b16 %v851
  %v954 = vunpack.c.l.b16 %v852
  %v955 = vunpack.c.l.b16 %v853
  %v956 = vunpack.c.l.b16 %v854
  %v957 = vunpack.c.l.b16 %v855
  %v958 = vunpack.c.l.b16 %v856
  %v959 = vunpack.c.l.b16 %v857
  %v960 = vunpack.c.l.b16 %v858
  %v961 = vunpack.c.l.b16 %v859
  %v962 = vunpack.c.l.b16 %v860
  %v963 = vunpack.c.l.b16 %v861
  %v964 = vunpack.c.l.b16 %v862
  %v965 = vunpack.c.l.b16 %v863
  %v966 = vunpack.c.l.b16 %v864
  %v967 = vunpack.c.l.b16 %v865
  %v968 = vunpack.c.l.b16 %v866
  %v969 = vunpack.c.l.b16 %v867
  %v970 = vunpack.c.l.b16 %v868
  %v971 = vunpack.c.l.b16 %v869
  %v972 = vunpack.c.l.b16 %v870
  %v973 = vunpack.c.l.b16 %v871
  %v974 = vunpack.c.l.b16 %v872
  %v975 = vunpack.c.l.b16 %v873
  %v976 = vunpack.c.l.b16 %v874
  %v977 = vunpack.c.l.b16 %v875
  %v978 = vunpack.c.l.b16 %v876
  %v979 = vunpack.c.l.b16 %v877
  %v980 = vunpack.c.l.b16 %v878
  %v981 = vunpack.c.l.b16 %v879
  %v982 = vunpack.c.l.b16 %v880
  %v983 = vunpack.c.l.b16 %v881
  %v984 = vunpack.c.l.b16 %v882
  %v985 = vunpack.c.l.b16 %v883
  %v986 = vunpack.c.l.b16 %v884
  %v987 = vunpack.c.l.b16 %v885
  %v988 = vunpack.c.l.b16 %v886
  %v989 = vunpack.c.l.b16 %v887
  %v990 = vunpack.c.l.b16 %v888
  %v991 = vunpack.c.l.b16 %v889
  %v992 = vunpack.c.l.b16 %v890
  %v993 = vunpack.c.l.b16 %v891
  %v994 = vunpack.c.l.b16 %v892
  %v995 = vunpack.c.l.b16 %v893
  %v996 = vunpack.c.l.b16 %v894
  %v997 = vunpack.c.l.b16 %v895
  %v998 = vunpack.c.l.b16 %v896
  %v999 = vunpack.c.l.b16 %v897
  %v1000 = vunpack.c.l.b16 %v898
  %v1001 = vpack.c.b16 %v951, %v950
  %v1002 = vpack.c.b16 %v953, %v952
  %v1003 = vpack.c.b16 %v955, %v954
  %v1004 = vpack.c.b16 %v957, %v956
  %v1005 = vpack.c.b16 %v959, %v958
  %v1006 = vpack.c.b16 %v961, %v960
  %v1007 = vpack.c.b16 %v963, %v962
  %v1008 = vpack.c.b16 %v965, %v964
  %v1009 = vpack.c.b16 %v967, %v966
  %v1010 = vpack.c.b16 %v969, %v968
  %v1011 = vpack.c.b16 %v971, %v970
  %v1012 = vpack.c.b16 %v973, %v972
  %v1013 = vpack.c.b16 %v975, %v974
  %v1014 = vpack.c.b16 %v977, %v976
  %v1015 = vpack.c.b16 %v979, %v978
  %v1016 = vpack.c.b16 %v981, %v980
  %v1017 = vpack.c.b16 %v983, %v982
  %v1018 = vpack.c.b16 %v985, %v984
  %v1019 = vpack.c.b16 %v987, %v986
  %v1020 = vpack.c.b16 %v989, %v988
  %v1021 = vpack.c.b16 %v991, %v990
  %v1022 = vpack.c.b16 %v993, %v992
  %v1023 = vpack.c.b16 %v995, %v994
  %v1024 = vpack.c.b16 %v997, %v996
  %v1025 = vpack.c.b16 %v999, %v998
  %v1026 = vpack.c.b16 %v1000, %v1000
  %v1053 = vsel %vm471, %v830, 0
  %v1056 = vsel %vm471, %v831, 0
  %v1059 = vsel %vm27, %v1026, 0
  %1061 = vmatpush.bf16.msra.mxu0 %v1008
  %1062 = vmatpush.bf16.msra.mxu0 %v1007
  %1063 = vmatpush.bf16.msra.mxu0 %v1006
  %1064 = vmatpush.bf16.msra.mxu0 %v1005
  %1065 = vmatpush.bf16.msra.mxu0 %v1004
  %1066 = vmatpush.bf16.msra.mxu0 %v1003
  %1067 = vmatpush.bf16.msra.mxu0 %v1002
  %1068 = vmatpush.bf16.msra.mxu0 %v1001
  %1069 = vmatmul.bf16.gmra.mxu0 %v782
  %v1070 = vpop.f32.mrf.mxu0
  %v1071 = vadd.f32 0.0, %v1070
  %v1072 = vpop.f32.mrf.mxu0
  %v1073 = vadd.f32 0.0, %v1072
  %1074 = vmatmul.bf16.gmra.mxu0 %v784
  %v1075 = vpop.f32.mrf.mxu0
  %v1076 = vadd.f32 0.0, %v1075
  %v1077 = vpop.f32.mrf.mxu0
  %v1078 = vadd.f32 0.0, %v1077
  %1079 = vdwg.mxu0
  %1080 = vmatpush.bf16.msra.mxu0 %v1016
  %1081 = vmatpush.bf16.msra.mxu0 %v1015
  %1082 = vmatpush.bf16.msra.mxu0 %v1014
  %1083 = vmatpush.bf16.msra.mxu0 %v1013
  %1084 = vmatpush.bf16.msra.mxu0 %v1012
  %1085 = vmatpush.bf16.msra.mxu0 %v1011
  %1086 = vmatpush.bf16.msra.mxu0 %v1010
  %1087 = vmatpush.bf16.msra.mxu0 %v1009
  %1088 = vmatmul.bf16.gmra.mxu0 %v834
  %v1089 = vpop.f32.mrf.mxu0
  %v1090 = vadd.f32 %v1071, %v1089
  %v1091 = vpop.f32.mrf.mxu0
  %v1092 = vadd.f32 %v1073, %v1091
  %1093 = vmatmul.bf16.gmra.mxu0 %v838
  %v1094 = vpop.f32.mrf.mxu0
  %v1095 = vadd.f32 %v1076, %v1094
  %v1096 = vpop.f32.mrf.mxu0
  %v1097 = vadd.f32 %v1078, %v1096
  %1098 = vdwg.mxu0
  %1099 = vmatpush.bf16.msra.mxu0 %v1024
  %1100 = vmatpush.bf16.msra.mxu0 %v1023
  %1101 = vmatpush.bf16.msra.mxu0 %v1022
  %1102 = vmatpush.bf16.msra.mxu0 %v1021
  %1103 = vmatpush.bf16.msra.mxu0 %v1020
  %1104 = vmatpush.bf16.msra.mxu0 %v1019
  %1105 = vmatpush.bf16.msra.mxu0 %v1018
  %1106 = vmatpush.bf16.msra.mxu0 %v1017
  %1107 = vmatmul.bf16.gmra.mxu0 %v842
  %v1108 = vpop.f32.mrf.mxu0
  %v1109 = vadd.f32 %v1090, %v1108
  %v1110 = vpop.f32.mrf.mxu0
  %v1111 = vadd.f32 %v1092, %v1110
  %1112 = vmatmul.bf16.gmra.mxu0 %v846
  %v1113 = vpop.f32.mrf.mxu0
  %v1114 = vadd.f32 %v1095, %v1113
  %v1115 = vpop.f32.mrf.mxu0
  %v1116 = vadd.f32 %v1097, %v1115
  %1117 = vdwg.mxu0
  %1118 = vmatpush.bf16.msra.mxu0 0
  %1119 = vmatpush.bf16.msra.mxu0 0
  %1120 = vmatpush.bf16.msra.mxu0 0
  %1121 = vmatpush.bf16.msra.mxu0 0
  %1122 = vmatpush.bf16.msra.mxu0 0
  %1123 = vmatpush.bf16.msra.mxu0 0
  %1124 = vmatpush.bf16.msra.mxu0 %v1059
  %1125 = vmatpush.bf16.msra.mxu0 %v1025
  %1126 = vmatmul.bf16.gmra.mxu0 %v1053
  %v1127 = vpop.f32.mrf.mxu0
  %v1128 = vadd.f32 %v1109, %v1127
  %v1129 = vpop.f32.mrf.mxu0
  %v1130 = vadd.f32 %v1111, %v1129
  %1131 = vmatmul.bf16.gmra.mxu0 %v1056
  %v1132 = vpop.f32.mrf.mxu0
  %v1133 = vadd.f32 %v1114, %v1132
  %v1134 = vpop.f32.mrf.mxu0
  %v1135 = vadd.f32 %v1116, %v1134
  %1136 = vdwg.mxu0
  %v1137 = vld [vmem:[%s5] sm:$0x1]
  %v1138 = vld [vmem:[%s6] sm:$0x1]
  %v1139 = vadd.f32 %v1128, %v1130
  %v1140 = vadd.f32 %v1139, %v1133
  %v1141 = vadd.f32 %v1140, %v1135
  %v1142 = vrot.slane %v1141, 4
  %v1143 = vadd.f32 %v1141, %v1142
  %v1144 = vrot.slane %v1143, 2
  %v1145 = vadd.f32 %v1143, %v1144
  %v1146 = vrot.slane %v1145, 1
  %v1147 = vadd.f32 %v1145, %v1146
  %v1148 = vmul.f32 %v1128, %v1128
  %v1149 = vmul.f32 %v1130, %v1130
  %v1150 = vmul.f32 %v1133, %v1133
  %v1151 = vmul.f32 %v1135, %v1135
  %v1152 = vadd.f32 %v1148, %v1149
  %v1153 = vadd.f32 %v1152, %v1150
  %v1154 = vadd.f32 %v1153, %v1151
  %v1155 = vrot.slane %v1154, 4
  %v1156 = vadd.f32 %v1154, %v1155
  %v1157 = vrot.slane %v1156, 2
  %v1158 = vadd.f32 %v1156, %v1157
  %v1159 = vrot.slane %v1158, 1
  %v1160 = vadd.f32 %v1158, %v1159
  %v1161 = vsel %vm581, %v1147, %v1160
  %1162 = vrot.lane.b32.xlu0 %v1161, 8
  %v1163 = vpop.permute.xlu0 %1162
  %v1164 = vadd.f32 %v1161, %v1163
  %1165 = vrot.lane.b32.xlu0 %v1164, 16
  %v1166 = vpop.permute.xlu0 %1165
  %v1167 = vadd.f32 %v1164, %v1166
  %1168 = vrot.lane.b32.xlu0 %v1167, 32
  %v1169 = vpop.permute.xlu0 %1168
  %v1170 = vadd.f32 %v1167, %v1169
  %1171 = vrot.lane.b32.xlu0 %v1170, 64
  %v1172 = vpop.permute.xlu0 %1171
  %v1173 = vadd.f32 %v1170, %v1172
  %v1174 = vmul.f32 %v1173, 0.001953125
  %v1175 = vmul.f32 %v1174, %v1174
  %v1177 = vrot.slane %v1175, 7
  %v1179 = vsub.f32 %v1174, %v1177
  %v1180 = vperm.slane %v1174, 0
  %v1181 = vsub.f32 %v1128, %v1180
  %v1182 = vsub.f32 %v1130, %v1180
  %v1183 = vsub.f32 %v1133, %v1180
  %v1184 = vsub.f32 %v1135, %v1180
  %v1185 = vadd.f32 %v1179, 1e-05
  %v1186 = vrsqrt.pop %v1185
  %v1187 = vmul.f32 %v1186, %v1185
  %v1188 = vmul.f32 %v1187, %v1186
  %v1189 = vmul.f32 0.5, %v1188
  %v1190 = vsub.f32 1.5, %v1189
  %v1191 = vmul.f32 %v1186, %v1190
  %vm1192 = vweird.f32 %v1185
  %vm1193 = vweird.f32 %v1186
  %vm1194 = vmor %vm1192, %vm1193
  %v1195 = vsel %vm1194, %v1186, %v1191
  %v1196 = vperm.slane %v1195, 1
  %v1197 = vmul.f32 %v1181, %v1196
  %v1198 = vmul.f32 %v1182, %v1196
  %v1199 = vmul.f32 %v1183, %v1196
  %v1200 = vmul.f32 %v1184, %v1196
  %v1202 = vperm.slane %v1137, 0
  %v1204 = vmul.f32 %v1197, %v1202
  %v1205 = vmul.f32 %v1198, %v1202
  %v1206 = vmul.f32 %v1199, %v1202
  %v1207 = vmul.f32 %v1200, %v1202
  %v1209 = vperm.slane %v1138, 0
  %v1211 = vadd.f32 %v1204, %v1209
  %v1212 = vadd.f32 %v1205, %v1209
  %v1213 = vadd.f32 %v1206, %v1209
  %v1214 = vadd.f32 %v1207, %v1209
  %v1215 = vld [vmem:[%s0] sm:$0xff]
  %v1216 = vld [vmem:[%s0 + $0x8] sm:$0xff]
  %v1217 = vld [vmem:[%s0 + $0x10] sm:$0xff]
  %v1218 = vld [vmem:[%s0 + $0x18] sm:$0xff]
  %v1219 = vadd.f32 %v1211, %v1215
  %v1220 = vadd.f32 %v1212, %v1216
  %v1221 = vadd.f32 %v1213, %v1217
  %v1222 = vadd.f32 %v1214, %v1218
  %v1223 = vmax.f32 %v1219, 0.0
  %v1224 = vmax.f32 %v1220, 0.0
  %v1225 = vmax.f32 %v1221, 0.0
  %v1226 = vmax.f32 %v1222, 0.0
  %1227 = vst [vmem:[%s7] sm:$0xff] %v1223
  %1228 = vst [vmem:[%s7 + $0x8] sm:$0xff] %v1224
  %1229 = vst [vmem:[%s7 + $0x10] sm:$0xff] %v1225
  %1230 = vst [vmem:[%s7 + $0x18] sm:$0xff] %v1226
  // Predicated region
  $region30: #{basic_block_fused.1} parent=0 // pred_check
    _
  $region31: #{basic_block_fused.1} parent=0 // pred_check_branch
    %1232 = sbr.rel (0) target = $region33
  $region32: #{basic_block_fused.1} parent=0 // pred_region
    _
  $region33: #{basic_block_fused.1} parent=0 // pred_fallthru
    _
  // Predicated region
  $region34: #{basic_block_fused.1} parent=0 // pred_check
    _
  $region35: #{basic_block_fused.1} parent=0 // pred_check_branch
    %1234 = sbr.rel (0) target = $region37
  $region36: #{basic_block_fused.1} parent=0 // pred_region
    _
  $region37: #{basic_block_fused.1} parent=0 // pred_fallthru
    _

</llo_original>
